<compile_context>
chip_gen: v7x
topology: tpu7x:2x2x1
jax: 0.10.0
libtpu: 0.0.40
codegen_flags: <defaults>
</compile_context>

<pallas_src>
import jax
import jax.numpy as jnp
from jax.experimental import pallas as pl
from jax.experimental.pallas import tpu as pltpu


def _round_up(n, m):
    return ((n + m - 1) // m) * m


def mlp_kernel(x_ref, w1_ref, b1_ref, w2_ref, b2_ref, w3_ref, b3_ref, o_ref):
    # Feature-major (transposed) layout — batch is the last (lane) axis:
    #   x_ref : (5,  TB)                 w1 : (64, 5)    b1 : (64, 1)
    #   w2    : (64, 64)  b2 : (64, 1)   w3 : (2, 64)    b3 : (2, 1)
    #   o_ref : (2,  TB)
    x = x_ref[...]

    # fc1 + relu   (accumulate in f32 regardless of operand dtype)
    h1 = jnp.dot(w1_ref[...], x, preferred_element_type=jnp.float32) + b1_ref[...]
    h1 = jnp.maximum(h1, 0.0).astype(x.dtype)

    # fc2 + relu
    h2 = jnp.dot(w2_ref[...], h1, preferred_element_type=jnp.float32) + b2_ref[...]
    h2 = jnp.maximum(h2, 0.0).astype(x.dtype)

    # fc3
    out = jnp.dot(w3_ref[...], h2, preferred_element_type=jnp.float32) + b3_ref[...]
    o_ref[...] = out.astype(o_ref.dtype)


def net_forward(x, params, *, compute_dtype=jnp.float32, tb=None):
    """Forward pass equivalent to PyTorch Net.forward.

    x: (B, 5) float32.
    params: weights stored PyTorch-style (out_features, in_features); biases (out_features, 1).
    Returns (B, 2) float32.
    """
    B = x.shape[0]
    assert x.shape[1] == 5

    w1 = params["w1"].astype(compute_dtype)   # (64, 5)
    w2 = params["w2"].astype(compute_dtype)   # (64, 64)
    w3 = params["w3"].astype(compute_dtype)   # (2, 64)
    b1 = params["b1"].astype(jnp.float32)     # (64, 1)  -- biases stay f32 (added post-accumulation)
    b2 = params["b2"].astype(jnp.float32)     # (64, 1)
    b3 = params["b3"].astype(jnp.float32)     # (2, 1)

    # Batch tile: MXU-width aligned (256), capped at 1024 (fits v7x scoped VMEM easily).
    if tb is None:
        tb = min(1024, _round_up(B, 256))
    b_pad = _round_up(B, tb)
    n_tiles = b_pad // tb

    # Lane-dense transposed input, zero-padded up to a whole number of tiles.
    xt = jnp.zeros((5, b_pad), compute_dtype).at[:, :B].set(x.T.astype(compute_dtype))

    # Weights/biases: constant block index -> fetched once, VMEM-resident across grid steps.
    const = lambda shape: pl.BlockSpec(shape, lambda i: (0, 0))

    out_t = pl.pallas_call(
        mlp_kernel,
        out_shape=jax.ShapeDtypeStruct((2, b_pad), jnp.float32),
        grid=(n_tiles,),
        in_specs=[
            pl.BlockSpec((5, tb), lambda i: (0, i)),   # x tile: batch on lanes
            const(w1.shape), const(b1.shape),
            const(w2.shape), const(b2.shape),
            const(w3.shape), const(b3.shape),
        ],
        out_specs=pl.BlockSpec((2, tb), lambda i: (0, i)),
        compiler_params=pltpu.CompilerParams(
            dimension_semantics=("parallel",),  # v7x: shard batch tiles across both TensorCores
        ),
    )(xt, w1, b1, w2, b2, w3, b3)

    return out_t[:, :B].T  # back to (B, 2), matching the PyTorch layout


def net_reference(x, params):
    """Pure-JAX reference (PyTorch semantics: x @ W.T + b)."""
    h1 = jnp.maximum(x @ params["w1"].T + params["b1"].T, 0.0)
    h2 = jnp.maximum(h1 @ params["w2"].T + params["b2"].T, 0.0)
    return h2 @ params["w3"].T + params["b3"].T


def init_params(key):
    """Deterministic init mimicking PyTorch nn.Linear default U[-1/sqrt(fan_in), 1/sqrt(fan_in)]."""
    def linear_init(k, fan_in, fan_out):
        kw, kb = jax.random.split(k)
        bound = 1.0 / jnp.sqrt(fan_in)
        w = jax.random.uniform(kw, (fan_out, fan_in), jnp.float32, -bound, bound)
        b = jax.random.uniform(kb, (fan_out, 1), jnp.float32, -bound, bound)
        return w, b

    k1, k2, k3 = jax.random.split(key, 3)
    w1, b1 = linear_init(k1, 5, 64)
    w2, b2 = linear_init(k2, 64, 64)
    w3, b3 = linear_init(k3, 64, 2)
    return {"w1": w1, "b1": b1, "w2": w2, "b2": b2, "w3": w3, "b3": b3}


if __name__ == "__main__":
    key = jax.random.PRNGKey(0)
    k_params, k_x1, k_x2 = jax.random.split(key, 3)
    params = init_params(k_params)

    # Small shape consistent with the module (B=8 rows of 5 features).
    x_small = jax.random.normal(k_x1, (8, 5), dtype=jnp.float32)
    out = jax.block_until_ready(net_forward(x_small, params))
    ref = net_reference(x_small, params)
    assert out.shape == (8, 2)
    assert jnp.allclose(out, ref, atol=1e-5, rtol=1e-5)

    # Multi-tile grid with a batch that is not a multiple of the tile (exercises padding path).
    x_big = jax.random.normal(k_x2, (600, 5), dtype=jnp.float32)
    ref_big = net_reference(x_big, params)
    out_big = jax.block_until_ready(net_forward(x_big, params, tb=256))  # 3 grid steps
    assert out_big.shape == (600, 2)
    assert jnp.allclose(out_big, ref_big, atol=1e-5, rtol=1e-5)

    # bf16 MXU-operand fast path (v6e/v7x), f32 accumulation inside the kernel.
    out_bf16 = jax.block_until_ready(
        net_forward(x_big, params, compute_dtype=jnp.bfloat16, tb=256))
    assert jnp.allclose(out_bf16, ref_big, atol=5e-2, rtol=5e-2)

    print("KERNEL_OK")
</pallas_src>

<mosaic_0001>
module attributes {stable_mosaic.version = 11 : i64} {
  func.func @mlp_kernel(%arg0: i32, %arg1: memref<5x256xf32, #tpu.memory_space<vmem>>, %arg2: memref<64x5xf32, #tpu.memory_space<vmem>>, %arg3: memref<64x1xf32, #tpu.memory_space<vmem>>, %arg4: memref<64x64xf32, #tpu.memory_space<vmem>>, %arg5: memref<64x1xf32, #tpu.memory_space<vmem>>, %arg6: memref<2x64xf32, #tpu.memory_space<vmem>>, %arg7: memref<2x1xf32, #tpu.memory_space<vmem>>, %arg8: memref<2x256xf32, #tpu.memory_space<vmem>>) attributes {dimension_semantics = [#tpu.dimension_semantics<parallel>], iteration_bounds = array<i64: 1>, scalar_prefetch = 0 : i64, scratch_operands = 0 : i64, tpu.core_type = #tpu.core_type<tc>, window_params = [{transform_indices = @transform_0, window_bounds = array<i64: 5, 256>}, {pipeline_mode = #tpu.pipeline_mode<synchronous>, transform_indices = @transform_1, window_bounds = array<i64: 64, 5>}, {pipeline_mode = #tpu.pipeline_mode<synchronous>, transform_indices = @transform_2, window_bounds = array<i64: 64, 1>}, {pipeline_mode = #tpu.pipeline_mode<synchronous>, transform_indices = @transform_3, window_bounds = array<i64: 64, 64>}, {pipeline_mode = #tpu.pipeline_mode<synchronous>, transform_indices = @transform_4, window_bounds = array<i64: 64, 1>}, {pipeline_mode = #tpu.pipeline_mode<synchronous>, transform_indices = @transform_5, window_bounds = array<i64: 2, 64>}, {pipeline_mode = #tpu.pipeline_mode<synchronous>, transform_indices = @transform_6, window_bounds = array<i64: 2, 1>}, {transform_indices = @transform_7, window_bounds = array<i64: 2, 256>}]} {
    %c0 = arith.constant 0 : index
    %c0_0 = arith.constant 0 : index
    %0 = vector.load %arg1[%c0, %c0_0] : memref<5x256xf32, #tpu.memory_space<vmem>>, vector<5x256xf32>
    %c0_1 = arith.constant 0 : index
    %c0_2 = arith.constant 0 : index
    %1 = vector.load %arg2[%c0_1, %c0_2] : memref<64x5xf32, #tpu.memory_space<vmem>>, vector<64x5xf32>
    %cst = arith.constant dense<0.000000e+00> : vector<64x256xf32>
    %2 = tpu.matmul %1, %0, %cst {dimension_numbers = #tpu.dot_dimension_numbers<[1], [0], [0], [1], [0, 0, 1, 1], [], []>} : vector<64x5xf32>, vector<5x256xf32>, vector<64x256xf32> -> vector<64x256xf32>
    %c0_3 = arith.constant 0 : index
    %c0_4 = arith.constant 0 : index
    %3 = vector.load %arg3[%c0_3, %c0_4] : memref<64x1xf32, #tpu.memory_space<vmem>>, vector<64x1xf32>
    %4 = vector.broadcast %3 : vector<64x1xf32> to vector<64x256xf32>
    %5 = arith.addf %2, %4 : vector<64x256xf32>
    %cst_5 = arith.constant 0.000000e+00 : f32
    %6 = vector.broadcast %cst_5 : f32 to vector<64x256xf32>
    %7 = arith.maximumf %5, %6 : vector<64x256xf32>
    %c0_6 = arith.constant 0 : index
    %c0_7 = arith.constant 0 : index
    %8 = vector.load %arg4[%c0_6, %c0_7] : memref<64x64xf32, #tpu.memory_space<vmem>>, vector<64x64xf32>
    %cst_8 = arith.constant dense<0.000000e+00> : vector<64x256xf32>
    %9 = tpu.matmul %8, %7, %cst_8 {dimension_numbers = #tpu.dot_dimension_numbers<[1], [0], [0], [1], [0, 0, 1, 1], [], []>} : vector<64x64xf32>, vector<64x256xf32>, vector<64x256xf32> -> vector<64x256xf32>
    %c0_9 = arith.constant 0 : index
    %c0_10 = arith.constant 0 : index
    %10 = vector.load %arg5[%c0_9, %c0_10] : memref<64x1xf32, #tpu.memory_space<vmem>>, vector<64x1xf32>
    %11 = vector.broadcast %10 : vector<64x1xf32> to vector<64x256xf32>
    %12 = arith.addf %9, %11 : vector<64x256xf32>
    %cst_11 = arith.constant 0.000000e+00 : f32
    %13 = vector.broadcast %cst_11 : f32 to vector<64x256xf32>
    %14 = arith.maximumf %12, %13 : vector<64x256xf32>
    %c0_12 = arith.constant 0 : index
    %c0_13 = arith.constant 0 : index
    %15 = vector.load %arg6[%c0_12, %c0_13] : memref<2x64xf32, #tpu.memory_space<vmem>>, vector<2x64xf32>
    %cst_14 = arith.constant dense<0.000000e+00> : vector<2x256xf32>
    %16 = tpu.matmul %15, %14, %cst_14 {dimension_numbers = #tpu.dot_dimension_numbers<[1], [0], [0], [1], [0, 0, 1, 1], [], []>} : vector<2x64xf32>, vector<64x256xf32>, vector<2x256xf32> -> vector<2x256xf32>
    %c0_15 = arith.constant 0 : index
    %c0_16 = arith.constant 0 : index
    %17 = vector.load %arg7[%c0_15, %c0_16] : memref<2x1xf32, #tpu.memory_space<vmem>>, vector<2x1xf32>
    %18 = vector.broadcast %17 : vector<2x1xf32> to vector<2x256xf32>
    %19 = arith.addf %16, %18 : vector<2x256xf32>
    %c0_17 = arith.constant 0 : index
    %c0_18 = arith.constant 0 : index
    %20 = vector.load %arg8[%c0_17, %c0_18] : memref<2x256xf32, #tpu.memory_space<vmem>>, vector<2x256xf32>
    tpu.vector_store %arg8[%c0_17, %c0_18], %19 {strides = array<i32>} : memref<2x256xf32, #tpu.memory_space<vmem>>, vector<2x256xf32>,
    return
  }
  func.func @transform_0(%arg0: i32) -> (i32, i32) {
    %c0_i32 = arith.constant 0 : i32
    %c0_i32_0 = arith.constant 0 : i32
    return %c0_i32, %arg0 : i32, i32
  }
  func.func @transform_1(%arg0: i32) -> (i32, i32) {
    %c0_i32 = arith.constant 0 : i32
    %c0_i32_0 = arith.constant 0 : i32
    %c0_i32_1 = arith.constant 0 : i32
    return %c0_i32, %c0_i32_0 : i32, i32
  }
  func.func @transform_2(%arg0: i32) -> (i32, i32) {
    %c0_i32 = arith.constant 0 : i32
    %c0_i32_0 = arith.constant 0 : i32
    %c0_i32_1 = arith.constant 0 : i32
    return %c0_i32, %c0_i32_0 : i32, i32
  }
  func.func @transform_3(%arg0: i32) -> (i32, i32) {
    %c0_i32 = arith.constant 0 : i32
    %c0_i32_0 = arith.constant 0 : i32
    %c0_i32_1 = arith.constant 0 : i32
    return %c0_i32, %c0_i32_0 : i32, i32
  }
  func.func @transform_4(%arg0: i32) -> (i32, i32) {
    %c0_i32 = arith.constant 0 : i32
    %c0_i32_0 = arith.constant 0 : i32
    %c0_i32_1 = arith.constant 0 : i32
    return %c0_i32, %c0_i32_0 : i32, i32
  }
  func.func @transform_5(%arg0: i32) -> (i32, i32) {
    %c0_i32 = arith.constant 0 : i32
    %c0_i32_0 = arith.constant 0 : i32
    %c0_i32_1 = arith.constant 0 : i32
    return %c0_i32, %c0_i32_0 : i32, i32
  }
  func.func @transform_6(%arg0: i32) -> (i32, i32) {
    %c0_i32 = arith.constant 0 : i32
    %c0_i32_0 = arith.constant 0 : i32
    %c0_i32_1 = arith.constant 0 : i32
    return %c0_i32, %c0_i32_0 : i32, i32
  }
  func.func @transform_7(%arg0: i32) -> (i32, i32) {
    %c0_i32 = arith.constant 0 : i32
    %c0_i32_0 = arith.constant 0 : i32
    return %c0_i32, %arg0 : i32, i32
  }
}

</mosaic_0001>

<llo_original>
// kernel: tpu_custom_call.1
$region0: #{tpu_custom_call.1}
  #allocation0 [shape = 'u32[]', space=smem, size = 0x4, offset = 0x4, fixed_abs, tag = 'smem constant byte address 0x4 - core index']
  #allocation1 [shape = 'u32[144,128]{1,0:T(1,128)}', space=vmem, size = 0x12000, scoped, tag = 'internal scratch']
  %s0 = inlined_call_operand.vmem [shape: f32[5,256], index: 0, kind: input, shape index: {}]
  %s1 = inlined_call_operand.vmem [shape: f32[64,5], index: 1, kind: input, shape index: {}]
  %s2 = inlined_call_operand.vmem [shape: f32[64,1], index: 2, kind: input, shape index: {}]
  %s3 = inlined_call_operand.vmem [shape: f32[64,64], index: 3, kind: input, shape index: {}]
  %s4 = inlined_call_operand.vmem [shape: f32[64,1], index: 4, kind: input, shape index: {}]
  %s5 = inlined_call_operand.vmem [shape: f32[2,64], index: 5, kind: input, shape index: {}]
  %s6 = inlined_call_operand.vmem [shape: f32[2,1], index: 6, kind: input, shape index: {}]
  %s7 = inlined_call_operand.hbm [shape: f32[2,256], index: 7, kind: output, shape index: {}]
  %s8 = sld [smem:[#allocation0]]
  $region38: #{tpu_custom_call.1} parent=0
    _
  %s10 = ssub.s32 1, %s8
  %s11 = scalar_select 0, %s10, %s8
  $region1: #{tpu_custom_call.1} parent=0
    #allocation2 [shape = 'u8[2048]{0}', space=vmem, size = 0x800, scoped, tag = 'output window, operand 0, single buffered']
    #allocation3 [shape = 's32[1]{0}', space=sflag, size = 0x4, scoped, tag = 'scoped memory for tpu_custom_call.1']
    %12 = vsyncpa [#allocation3], 0
    // Predicated region
    $region2: #{tpu_custom_call.1} parent=1 // pred_check
      _
    $region3: #{tpu_custom_call.1} parent=1 // pred_check_branch
      %14 = sbr.rel (0) target = $region5
    $region4: #{tpu_custom_call.1} parent=1 // pred_region
      _
    $region5: #{tpu_custom_call.1} parent=1 // pred_fallthru
      _
    // Predicated region
    $region6: #{tpu_custom_call.1} parent=1 // pred_check
      _
    $region7: #{tpu_custom_call.1} parent=1 // pred_check_branch
      %16 = sbr.rel (0) target = $region9
    $region8: #{tpu_custom_call.1} parent=1 // pred_region
      _
    $region9: #{tpu_custom_call.1} parent=1 // pred_fallthru
      _
    // Predicated region
    $region10: #{tpu_custom_call.1} parent=1 // pred_check
      _
    $region11: #{tpu_custom_call.1} parent=1 // pred_check_branch
      %18 = sbr.rel (0) target = $region13
    $region12: #{tpu_custom_call.1} parent=1 // pred_region
      _
    $region13: #{tpu_custom_call.1} parent=1 // pred_fallthru
      _
    // Predicated region
    $region14: #{tpu_custom_call.1} parent=1 // pred_check
      _
    $region15: #{tpu_custom_call.1} parent=1 // pred_check_branch
      %20 = sbr.rel (0) target = $region17
    $region16: #{tpu_custom_call.1} parent=1 // pred_region
      _
    $region17: #{tpu_custom_call.1} parent=1 // pred_fallthru
      _
    // Predicated region
    $region18: #{tpu_custom_call.1} parent=1 // pred_check
      _
    $region19: #{tpu_custom_call.1} parent=1 // pred_check_branch
      %22 = sbr.rel (0) target = $region21
    $region20: #{tpu_custom_call.1} parent=1 // pred_region
      _
    $region21: #{tpu_custom_call.1} parent=1 // pred_fallthru
      _
    // Predicated region
    $region22: #{tpu_custom_call.1} parent=1 // pred_check
      _
    $region23: #{tpu_custom_call.1} parent=1 // pred_check_branch
      %24 = sbr.rel (0) target = $region25
    $region24: #{tpu_custom_call.1} parent=1 // pred_region
      _
    $region25: #{tpu_custom_call.1} parent=1 // pred_fallthru
      _
    // Predicated region
    $region26: #{tpu_custom_call.1} parent=1 // pred_check
      _
    $region27: #{tpu_custom_call.1} parent=1 // pred_check_branch
      %26 = sbr.rel (0) target = $region29
    $region28: #{tpu_custom_call.1} parent=1 // pred_region
      _
    $region29: #{tpu_custom_call.1} parent=1 // pred_fallthru
      _
    %v27 = vld [vmem:[%s0] sm:$0x1f]
    %v28 = vld [vmem:[%s0 + $0x8] sm:$0x1f]
    %v29 = vld [vmem:[%s1] sm:$0xff]
    %v30 = vld [vmem:[%s1 + $0x8] sm:$0xff]
    %v31 = vld [vmem:[%s1 + $0x10] sm:$0xff]
    %v32 = vld [vmem:[%s1 + $0x18] sm:$0xff]
    %v33 = vld [vmem:[%s1 + $0x20] sm:$0xff]
    %v34 = vld [vmem:[%s1 + $0x28] sm:$0xff]
    %v35 = vld [vmem:[%s1 + $0x30] sm:$0xff]
    %v36 = vld [vmem:[%s1 + $0x38] sm:$0xff]
    %v37 = vld [vmem:[%s2] sm:$0xff]
    %v38 = vld [vmem:[%s2 + $0x8] sm:$0xff]
    %v39 = vld [vmem:[%s2 + $0x10] sm:$0xff]
    %v40 = vld [vmem:[%s2 + $0x18] sm:$0xff]
    %v41 = vld [vmem:[%s2 + $0x20] sm:$0xff]
    %v42 = vld [vmem:[%s2 + $0x28] sm:$0xff]
    %v43 = vld [vmem:[%s2 + $0x30] sm:$0xff]
    %v44 = vld [vmem:[%s2 + $0x38] sm:$0xff]
    %46 = vset.pattern.permute.xlu0 0
    %47 = vperm.xlu0 %46, %v37
    %v48 = vpop.permute.xlu0 %47
    %51 = vset.pattern.permute.xlu0 0
    %52 = vperm.xlu0 %51, %v38
    %v53 = vpop.permute.xlu0 %52
    %56 = vset.pattern.permute.xlu0 0
    %57 = vperm.xlu0 %56, %v39
    %v58 = vpop.permute.xlu0 %57
    %61 = vset.pattern.permute.xlu0 0
    %62 = vperm.xlu0 %61, %v40
    %v63 = vpop.permute.xlu0 %62
    %66 = vset.pattern.permute.xlu0 0
    %67 = vperm.xlu0 %66, %v41
    %v68 = vpop.permute.xlu0 %67
    %71 = vset.pattern.permute.xlu0 0
    %72 = vperm.xlu0 %71, %v42
    %v73 = vpop.permute.xlu0 %72
    %76 = vset.pattern.permute.xlu0 0
    %77 = vperm.xlu0 %76, %v43
    %v78 = vpop.permute.xlu0 %77
    %81 = vset.pattern.permute.xlu0 0
    %82 = vperm.xlu0 %81, %v44
    %v83 = vpop.permute.xlu0 %82
    %vm85 = vcmask 39936
    %v87 = vsel %vm85, %v29, 0
    %v90 = vsel %vm85, %v30, 0
    %v93 = vsel %vm85, %v31, 0
    %v96 = vsel %vm85, %v32, 0
    %v99 = vsel %vm85, %v33, 0
    %v102 = vsel %vm85, %v34, 0
    %v105 = vsel %vm85, %v35, 0
    %v108 = vsel %vm85, %v36, 0
    %vm110 = vcmask 1044480
    %v112 = vsel %vm110, %v27, 0
    %v115 = vsel %vm110, %v28, 0
    %117 = vmatprep.subr.mxu0 %v115
    %118 = vmatpush1.msra.mxu0 %v112
    %119 = vmatprep.subr.mxu0 0.0
    %120 = vmatpush1.msra.mxu0 0.0
    %121 = vmatprep.subr.mxu0 0.0
    %122 = vmatpush1.msra.mxu0 0.0
    %123 = vmatprep.subr.mxu0 0.0
    %124 = vmatpush1.msra.mxu0 0.0
    %125 = vmatprep.subr.mxu0 0.0
    %126 = vmatpush1.msra.mxu0 0.0
    %127 = vmatprep.subr.mxu0 0.0
    %128 = vmatpush1.msra.mxu0 0.0
    %129 = vmatprep.subr.mxu0 0.0
    %130 = vmatpush1.msra.mxu0 0.0
    %131 = vmatprep.subr.mxu0 0.0
    %132 = vmatpush1.msra.mxu0 0.0
    %133 = vmatprep.subr.mxu0 0.0
    %134 = vmatpush1.msra.mxu0 0.0
    %135 = vmatprep.subr.mxu0 0.0
    %136 = vmatpush1.msra.mxu0 0.0
    %137 = vmatprep.subr.mxu0 0.0
    %138 = vmatpush1.msra.mxu0 0.0
    %139 = vmatprep.subr.mxu0 0.0
    %140 = vmatpush1.msra.mxu0 0.0
    %141 = vmatprep.subr.mxu0 0.0
    %142 = vmatpush1.msra.mxu0 0.0
    %143 = vmatprep.subr.mxu0 0.0
    %144 = vmatpush1.msra.mxu0 0.0
    %145 = vmatprep.subr.mxu0 0.0
    %146 = vmatpush1.msra.mxu0 0.0
    %147 = vmatprep.subr.mxu0 0.0
    %148 = vmatpush1.msra.mxu0 0.0
    %149 = vmatprep.subr.mxu0 0.0
    %150 = vmatpush1.msra.mxu0 0.0
    %151 = vmatprep.subr.mxu0 0.0
    %152 = vmatpush1.msra.mxu0 0.0
    %153 = vmatprep.subr.mxu0 0.0
    %154 = vmatpush1.msra.mxu0 0.0
    %155 = vmatprep.subr.mxu0 0.0
    %156 = vmatpush1.msra.mxu0 0.0
    %157 = vmatprep.subr.mxu0 0.0
    %158 = vmatpush1.msra.mxu0 0.0
    %159 = vmatprep.subr.mxu0 0.0
    %160 = vmatpush1.msra.mxu0 0.0
    %161 = vmatprep.subr.mxu0 0.0
    %162 = vmatpush1.msra.mxu0 0.0
    %163 = vmatprep.subr.mxu0 0.0
    %164 = vmatpush1.msra.mxu0 0.0
    %165 = vmatprep.subr.mxu0 0.0
    %166 = vmatpush1.msra.mxu0 0.0
    %167 = vmatprep.subr.mxu0 0.0
    %168 = vmatpush1.msra.mxu0 0.0
    %169 = vmatprep.subr.mxu0 0.0
    %170 = vmatpush1.msra.mxu0 0.0
    %171 = vmatprep.subr.mxu0 0.0
    %172 = vmatpush1.msra.mxu0 0.0
    %173 = vmatprep.subr.mxu0 0.0
    %174 = vmatpush1.msra.mxu0 0.0
    %175 = vmatprep.subr.mxu0 0.0
    %176 = vmatpush1.msra.mxu0 0.0
    %177 = vmatprep.subr.mxu0 0.0
    %178 = vmatpush1.msra.mxu0 0.0
    %179 = vmatprep.subr.mxu0 0.0
    %180 = vmatpush1.msra.mxu0 0.0
    %181 = vmatprep.mubr.f32.mxu0 0.0
    %182 = vmatmul.mubr.f32.gmra.mrb[0].mxu0 %v87
    %v183 = vpop.f32.mrb[0].mxu0
    %v184 = vadd.f32 %v48, %v183
    %v185 = vpop.f32.mrb[0].mxu0
    %v186 = vadd.f32 %v48, %v185
    %187 = vmatprep.mubr.f32.mxu0 0.0
    %188 = vmatmul.mubr.f32.gmra.mrb[0].mxu0 %v90
    %v189 = vpop.f32.mrb[0].mxu0
    %v190 = vadd.f32 %v53, %v189
    %v191 = vpop.f32.mrb[0].mxu0
    %v192 = vadd.f32 %v53, %v191
    %193 = vmatprep.mubr.f32.mxu0 0.0
    %194 = vmatmul.mubr.f32.gmra.mrb[0].mxu0 %v93
    %v195 = vpop.f32.mrb[0].mxu0
    %v196 = vadd.f32 %v58, %v195
    %v197 = vpop.f32.mrb[0].mxu0
    %v198 = vadd.f32 %v58, %v197
    %199 = vmatprep.mubr.f32.mxu0 0.0
    %200 = vmatmul.mubr.f32.gmra.mrb[0].mxu0 %v96
    %v201 = vpop.f32.mrb[0].mxu0
    %v202 = vadd.f32 %v63, %v201
    %v203 = vpop.f32.mrb[0].mxu0
    %v204 = vadd.f32 %v63, %v203
    %205 = vmatprep.mubr.f32.mxu0 0.0
    %206 = vmatmul.mubr.f32.gmra.mrb[0].mxu0 %v99
    %v207 = vpop.f32.mrb[0].mxu0
    %v208 = vadd.f32 %v68, %v207
    %v209 = vpop.f32.mrb[0].mxu0
    %v210 = vadd.f32 %v68, %v209
    %211 = vmatprep.mubr.f32.mxu0 0.0
    %212 = vmatmul.mubr.f32.gmra.mrb[0].mxu0 %v102
    %v213 = vpop.f32.mrb[0].mxu0
    %v214 = vadd.f32 %v73, %v213
    %v215 = vpop.f32.mrb[0].mxu0
    %v216 = vadd.f32 %v73, %v215
    %217 = vmatprep.mubr.f32.mxu0 0.0
    %218 = vmatmul.mubr.f32.gmra.mrb[0].mxu0 %v105
    %v219 = vpop.f32.mrb[0].mxu0
    %v220 = vadd.f32 %v78, %v219
    %v221 = vpop.f32.mrb[0].mxu0
    %v222 = vadd.f32 %v78, %v221
    %223 = vmatprep.mubr.f32.mxu0 0.0
    %224 = vmatmul.mubr.f32.gmra.mrb[0].mxu0 %v108
    %v225 = vpop.f32.mrb[0].mxu0
    %v226 = vadd.f32 %v83, %v225
    %v227 = vpop.f32.mrb[0].mxu0
    %v228 = vadd.f32 %v83, %v227
    %229 = vdwg.mxu0
    %v230 = vmax.f32 %v184, 0.0
    %v231 = vmax.f32 %v186, 0.0
    %v232 = vmax.f32 %v190, 0.0
    %v233 = vmax.f32 %v192, 0.0
    %v234 = vmax.f32 %v196, 0.0
    %v235 = vmax.f32 %v198, 0.0
    %v236 = vmax.f32 %v202, 0.0
    %v237 = vmax.f32 %v204, 0.0
    %v238 = vmax.f32 %v208, 0.0
    %v239 = vmax.f32 %v210, 0.0
    %v240 = vmax.f32 %v214, 0.0
    %v241 = vmax.f32 %v216, 0.0
    %v242 = vmax.f32 %v220, 0.0
    %v243 = vmax.f32 %v222, 0.0
    %v244 = vmax.f32 %v226, 0.0
    %v245 = vmax.f32 %v228, 0.0
    %v246 = vld [vmem:[%s3] sm:$0xff]
    %v247 = vld [vmem:[%s3 + $0x8] sm:$0xff]
    %v248 = vld [vmem:[%s3 + $0x10] sm:$0xff]
    %v249 = vld [vmem:[%s3 + $0x18] sm:$0xff]
    %v250 = vld [vmem:[%s3 + $0x20] sm:$0xff]
    %v251 = vld [vmem:[%s3 + $0x28] sm:$0xff]
    %v252 = vld [vmem:[%s3 + $0x30] sm:$0xff]
    %v253 = vld [vmem:[%s3 + $0x38] sm:$0xff]
    %v254 = vld [vmem:[%s4] sm:$0xff]
    %v255 = vld [vmem:[%s4 + $0x8] sm:$0xff]
    %v256 = vld [vmem:[%s4 + $0x10] sm:$0xff]
    %v257 = vld [vmem:[%s4 + $0x18] sm:$0xff]
    %v258 = vld [vmem:[%s4 + $0x20] sm:$0xff]
    %v259 = vld [vmem:[%s4 + $0x28] sm:$0xff]
    %v260 = vld [vmem:[%s4 + $0x30] sm:$0xff]
    %v261 = vld [vmem:[%s4 + $0x38] sm:$0xff]
    %263 = vset.pattern.permute.xlu0 0
    %264 = vperm.xlu0 %263, %v254
    %v265 = vpop.permute.xlu0 %264
    %268 = vset.pattern.permute.xlu0 0
    %269 = vperm.xlu0 %268, %v255
    %v270 = vpop.permute.xlu0 %269
    %273 = vset.pattern.permute.xlu0 0
    %274 = vperm.xlu0 %273, %v256
    %v275 = vpop.permute.xlu0 %274
    %278 = vset.pattern.permute.xlu0 0
    %279 = vperm.xlu0 %278, %v257
    %v280 = vpop.permute.xlu0 %279
    %283 = vset.pattern.permute.xlu0 0
    %284 = vperm.xlu0 %283, %v258
    %v285 = vpop.permute.xlu0 %284
    %288 = vset.pattern.permute.xlu0 0
    %289 = vperm.xlu0 %288, %v259
    %v290 = vpop.permute.xlu0 %289
    %293 = vset.pattern.permute.xlu0 0
    %294 = vperm.xlu0 %293, %v260
    %v295 = vpop.permute.xlu0 %294
    %298 = vset.pattern.permute.xlu0 0
    %299 = vperm.xlu0 %298, %v261
    %v300 = vpop.permute.xlu0 %299
    %vm302 = vcmask 523264
    %v304 = vsel %vm302, %v246, 0
    %v307 = vsel %vm302, %v247, 0
    %v310 = vsel %vm302, %v248, 0
    %v313 = vsel %vm302, %v249, 0
    %v316 = vsel %vm302, %v250, 0
    %v319 = vsel %vm302, %v251, 0
    %v322 = vsel %vm302, %v252, 0
    %v325 = vsel %vm302, %v253, 0
    %327 = vmatprep.subr.mxu0 %v231
    %328 = vmatpush1.msra.mxu0 %v230
    %329 = vmatprep.subr.mxu0 %v233
    %330 = vmatpush1.msra.mxu0 %v232
    %331 = vmatprep.subr.mxu0 %v235
    %332 = vmatpush1.msra.mxu0 %v234
    %333 = vmatprep.subr.mxu0 %v237
    %334 = vmatpush1.msra.mxu0 %v236
    %335 = vmatprep.subr.mxu0 %v239
    %336 = vmatpush1.msra.mxu0 %v238
    %337 = vmatprep.subr.mxu0 %v241
    %338 = vmatpush1.msra.mxu0 %v240
    %339 = vmatprep.subr.mxu0 %v243
    %340 = vmatpush1.msra.mxu0 %v242
    %341 = vmatprep.subr.mxu0 %v245
    %342 = vmatpush1.msra.mxu0 %v244
    %343 = vmatprep.subr.mxu0 0.0
    %344 = vmatpush1.msra.mxu0 0.0
    %345 = vmatprep.subr.mxu0 0.0
    %346 = vmatpush1.msra.mxu0 0.0
    %347 = vmatprep.subr.mxu0 0.0
    %348 = vmatpush1.msra.mxu0 0.0
    %349 = vmatprep.subr.mxu0 0.0
    %350 = vmatpush1.msra.mxu0 0.0
    %351 = vmatprep.subr.mxu0 0.0
    %352 = vmatpush1.msra.mxu0 0.0
    %353 = vmatprep.subr.mxu0 0.0
    %354 = vmatpush1.msra.mxu0 0.0
    %355 = vmatprep.subr.mxu0 0.0
    %356 = vmatpush1.msra.mxu0 0.0
    %357 = vmatprep.subr.mxu0 0.0
    %358 = vmatpush1.msra.mxu0 0.0
    %359 = vmatprep.subr.mxu0 0.0
    %360 = vmatpush1.msra.mxu0 0.0
    %361 = vmatprep.subr.mxu0 0.0
    %362 = vmatpush1.msra.mxu0 0.0
    %363 = vmatprep.subr.mxu0 0.0
    %364 = vmatpush1.msra.mxu0 0.0
    %365 = vmatprep.subr.mxu0 0.0
    %366 = vmatpush1.msra.mxu0 0.0
    %367 = vmatprep.subr.mxu0 0.0
    %368 = vmatpush1.msra.mxu0 0.0
    %369 = vmatprep.subr.mxu0 0.0
    %370 = vmatpush1.msra.mxu0 0.0
    %371 = vmatprep.subr.mxu0 0.0
    %372 = vmatpush1.msra.mxu0 0.0
    %373 = vmatprep.subr.mxu0 0.0
    %374 = vmatpush1.msra.mxu0 0.0
    %375 = vmatprep.subr.mxu0 0.0
    %376 = vmatpush1.msra.mxu0 0.0
    %377 = vmatprep.subr.mxu0 0.0
    %378 = vmatpush1.msra.mxu0 0.0
    %379 = vmatprep.subr.mxu0 0.0
    %380 = vmatpush1.msra.mxu0 0.0
    %381 = vmatprep.subr.mxu0 0.0
    %382 = vmatpush1.msra.mxu0 0.0
    %383 = vmatprep.subr.mxu0 0.0
    %384 = vmatpush1.msra.mxu0 0.0
    %385 = vmatprep.subr.mxu0 0.0
    %386 = vmatpush1.msra.mxu0 0.0
    %387 = vmatprep.subr.mxu0 0.0
    %388 = vmatpush1.msra.mxu0 0.0
    %389 = vmatprep.subr.mxu0 0.0
    %390 = vmatpush1.msra.mxu0 0.0
    %391 = vmatprep.mubr.f32.mxu0 0.0
    %392 = vmatmul.mubr.f32.gmra.mrb[0].mxu0 %v304
    %v393 = vpop.f32.mrb[0].mxu0
    %v394 = vadd.f32 %v265, %v393
    %v395 = vpop.f32.mrb[0].mxu0
    %v396 = vadd.f32 %v265, %v395
    %397 = vmatprep.mubr.f32.mxu0 0.0
    %398 = vmatmul.mubr.f32.gmra.mrb[0].mxu0 %v307
    %v399 = vpop.f32.mrb[0].mxu0
    %v400 = vadd.f32 %v270, %v399
    %v401 = vpop.f32.mrb[0].mxu0
    %v402 = vadd.f32 %v270, %v401
    %403 = vmatprep.mubr.f32.mxu0 0.0
    %404 = vmatmul.mubr.f32.gmra.mrb[0].mxu0 %v310
    %v405 = vpop.f32.mrb[0].mxu0
    %v406 = vadd.f32 %v275, %v405
    %v407 = vpop.f32.mrb[0].mxu0
    %v408 = vadd.f32 %v275, %v407
    %409 = vmatprep.mubr.f32.mxu0 0.0
    %410 = vmatmul.mubr.f32.gmra.mrb[0].mxu0 %v313
    %v411 = vpop.f32.mrb[0].mxu0
    %v412 = vadd.f32 %v280, %v411
    %v413 = vpop.f32.mrb[0].mxu0
    %v414 = vadd.f32 %v280, %v413
    %415 = vmatprep.mubr.f32.mxu0 0.0
    %416 = vmatmul.mubr.f32.gmra.mrb[0].mxu0 %v316
    %v417 = vpop.f32.mrb[0].mxu0
    %v418 = vadd.f32 %v285, %v417
    %v419 = vpop.f32.mrb[0].mxu0
    %v420 = vadd.f32 %v285, %v419
    %421 = vmatprep.mubr.f32.mxu0 0.0
    %422 = vmatmul.mubr.f32.gmra.mrb[0].mxu0 %v319
    %v423 = vpop.f32.mrb[0].mxu0
    %v424 = vadd.f32 %v290, %v423
    %v425 = vpop.f32.mrb[0].mxu0
    %v426 = vadd.f32 %v290, %v425
    %427 = vmatprep.mubr.f32.mxu0 0.0
    %428 = vmatmul.mubr.f32.gmra.mrb[0].mxu0 %v322
    %v429 = vpop.f32.mrb[0].mxu0
    %v430 = vadd.f32 %v295, %v429
    %v431 = vpop.f32.mrb[0].mxu0
    %v432 = vadd.f32 %v295, %v431
    %433 = vmatprep.mubr.f32.mxu0 0.0
    %434 = vmatmul.mubr.f32.gmra.mrb[0].mxu0 %v325
    %v435 = vpop.f32.mrb[0].mxu0
    %v436 = vadd.f32 %v300, %v435
    %v437 = vpop.f32.mrb[0].mxu0
    %v438 = vadd.f32 %v300, %v437
    %439 = vdwg.mxu0
    %v440 = vmax.f32 %v394, 0.0
    %v441 = vmax.f32 %v396, 0.0
    %v442 = vmax.f32 %v400, 0.0
    %v443 = vmax.f32 %v402, 0.0
    %v444 = vmax.f32 %v406, 0.0
    %v445 = vmax.f32 %v408, 0.0
    %v446 = vmax.f32 %v412, 0.0
    %v447 = vmax.f32 %v414, 0.0
    %v448 = vmax.f32 %v418, 0.0
    %v449 = vmax.f32 %v420, 0.0
    %v450 = vmax.f32 %v424, 0.0
    %v451 = vmax.f32 %v426, 0.0
    %v452 = vmax.f32 %v430, 0.0
    %v453 = vmax.f32 %v432, 0.0
    %v454 = vmax.f32 %v436, 0.0
    %v455 = vmax.f32 %v438, 0.0
    %v456 = vld [vmem:[%s5] sm:$0x3]
    %v457 = vld [vmem:[%s6] sm:$0x3]
    %459 = vset.pattern.permute.xlu0 0
    %460 = vperm.xlu0 %459, %v457
    %v461 = vpop.permute.xlu0 %460
    %v464 = vsel %vm302, %v456, 0
    %466 = vmatprep.subr.mxu0 %v441
    %467 = vmatpush1.msra.mxu0 %v440
    %468 = vmatprep.subr.mxu0 %v443
    %469 = vmatpush1.msra.mxu0 %v442
    %470 = vmatprep.subr.mxu0 %v445
    %471 = vmatpush1.msra.mxu0 %v444
    %472 = vmatprep.subr.mxu0 %v447
    %473 = vmatpush1.msra.mxu0 %v446
    %474 = vmatprep.subr.mxu0 %v449
    %475 = vmatpush1.msra.mxu0 %v448
    %476 = vmatprep.subr.mxu0 %v451
    %477 = vmatpush1.msra.mxu0 %v450
    %478 = vmatprep.subr.mxu0 %v453
    %479 = vmatpush1.msra.mxu0 %v452
    %480 = vmatprep.subr.mxu0 %v455
    %481 = vmatpush1.msra.mxu0 %v454
    %482 = vmatprep.subr.mxu0 0.0
    %483 = vmatpush1.msra.mxu0 0.0
    %484 = vmatprep.subr.mxu0 0.0
    %485 = vmatpush1.msra.mxu0 0.0
    %486 = vmatprep.subr.mxu0 0.0
    %487 = vmatpush1.msra.mxu0 0.0
    %488 = vmatprep.subr.mxu0 0.0
    %489 = vmatpush1.msra.mxu0 0.0
    %490 = vmatprep.subr.mxu0 0.0
    %491 = vmatpush1.msra.mxu0 0.0
    %492 = vmatprep.subr.mxu0 0.0
    %493 = vmatpush1.msra.mxu0 0.0
    %494 = vmatprep.subr.mxu0 0.0
    %495 = vmatpush1.msra.mxu0 0.0
    %496 = vmatprep.subr.mxu0 0.0
    %497 = vmatpush1.msra.mxu0 0.0
    %498 = vmatprep.subr.mxu0 0.0
    %499 = vmatpush1.msra.mxu0 0.0
    %500 = vmatprep.subr.mxu0 0.0
    %501 = vmatpush1.msra.mxu0 0.0
    %502 = vmatprep.subr.mxu0 0.0
    %503 = vmatpush1.msra.mxu0 0.0
    %504 = vmatprep.subr.mxu0 0.0
    %505 = vmatpush1.msra.mxu0 0.0
    %506 = vmatprep.subr.mxu0 0.0
    %507 = vmatpush1.msra.mxu0 0.0
    %508 = vmatprep.subr.mxu0 0.0
    %509 = vmatpush1.msra.mxu0 0.0
    %510 = vmatprep.subr.mxu0 0.0
    %511 = vmatpush1.msra.mxu0 0.0
    %512 = vmatprep.subr.mxu0 0.0
    %513 = vmatpush1.msra.mxu0 0.0
    %514 = vmatprep.subr.mxu0 0.0
    %515 = vmatpush1.msra.mxu0 0.0
    %516 = vmatprep.subr.mxu0 0.0
    %517 = vmatpush1.msra.mxu0 0.0
    %518 = vmatprep.subr.mxu0 0.0
    %519 = vmatpush1.msra.mxu0 0.0
    %520 = vmatprep.subr.mxu0 0.0
    %521 = vmatpush1.msra.mxu0 0.0
    %522 = vmatprep.subr.mxu0 0.0
    %523 = vmatpush1.msra.mxu0 0.0
    %524 = vmatprep.subr.mxu0 0.0
    %525 = vmatpush1.msra.mxu0 0.0
    %526 = vmatprep.subr.mxu0 0.0
    %527 = vmatpush1.msra.mxu0 0.0
    %528 = vmatprep.subr.mxu0 0.0
    %529 = vmatpush1.msra.mxu0 0.0
    %530 = vmatprep.mubr.f32.mxu0 0.0
    %531 = vmatmul.mubr.f32.gmra.mrb[0].mxu0 %v464
    %v532 = vpop.f32.mrb[0].mxu0
    %v533 = vadd.f32 %v461, %v532
    %v534 = vpop.f32.mrb[0].mxu0
    %v535 = vadd.f32 %v461, %v534
    %536 = vdwg.mxu0
    %v539 = vcombine.low %v533, %v535
    %v541 = vunpack.c.l.s4 1983009808
    %v542 = vunpack.c.0.s8 %v541
    %v543 = vlaneseq
    %v544 = vshrl.u32 %v543, 7
    %v545 = vsub.s32 %v542, %v544
    %v546 = vrot.slane %v539, %v545
    %548 = vst [vmem:[#allocation2] sm:$0xf] %v546
    // Predicated region
    $region30: #{tpu_custom_call.1} parent=1 // pred_check
      _
    $region31: #{tpu_custom_call.1} parent=1 // pred_check_branch
      %550 = sbr.rel (0) target = $region33
    $region32: #{tpu_custom_call.1} parent=1 // pred_region
      %s552 = ssub.s32 64, 64
      %553 = vsyncadd [#allocation3], %s552
      %s555 = sshll.u32 [#allocation2], 4
      %s556 = int_to_ptr.vmem [resolvable:$true] %s555
      %558 = dma.vmem_to_hbm [thread:$0]  %s556, 64, %s7, [#allocation3]
    $region33: #{tpu_custom_call.1} parent=1 // pred_fallthru
      _
    // Predicated region
    $region34: #{tpu_custom_call.1} parent=1 // pred_check
      _
    $region35: #{tpu_custom_call.1} parent=1 // pred_check_branch
      %560 = sbr.rel (0) target = $region37
    $region36: #{tpu_custom_call.1} parent=1 // pred_region
      %561 = dma.done [#allocation3], 64
    $region37: #{tpu_custom_call.1} parent=1 // pred_fallthru
      _
    %562 = vsyncpa [#allocation3], 1

</llo_original>
